<compile_context>
chip_gen: v6e
topology: v6e:2x2x1
jax: 0.10.0
libtpu: 0.0.40
codegen_flags: <defaults>
</compile_context>

<pallas_src>
import math

import jax
import jax.numpy as jnp
from jax.experimental import pallas as pl
from jax.experimental.pallas import tpu as pltpu

NUM_JOINTS = 39      # convert_tssi=True branch
RESIZE_TO = 64       # args.model_args.resize_to


def _linear_kernel(x_ref, w_ref, b_ref, o_ref):
    # x_ref: (tm, Jw)  w_ref: (Jw, Rw)  b_ref: (1, Rw) f32  o_ref: (tm, Rw)
    acc = jnp.dot(x_ref[...], w_ref[...], preferred_element_type=jnp.float32)
    o_ref[...] = (acc + b_ref[...]).astype(o_ref.dtype)


def _round_up(v, m):
    return ((v + m - 1) // m) * m


def _pick_tile(M, tm, sub):
    """Round tm to the sublane multiple, keep grid >= 2 and even when possible."""
    tm = max(sub, (int(tm) // sub) * sub)
    if tm >= M:
        if M > sub:
            tm = _round_up((M + 1) // 2, sub)   # two roughly equal tiles
        else:
            tm = sub
    grid = pl.cdiv(M, tm)
    if grid > 1 and grid % 2 == 1:
        # nudge to an even grid so both TensorCores (v7x) get balanced work
        tm = _round_up(pl.cdiv(M, grid + 1), sub)
        grid = pl.cdiv(M, tm)
    return tm, grid


def learnable_resize_linear(x, weight, bias, *, tm=2048, out_dtype=None):
    """x: (B, C, T, J); weight: (R, J); bias: (R,).  Returns (B, C, T, R).

    tm: row tile over the flattened-and-folded row axis. Sweep 2048-8192 for
        very large M (v7x benefits most from big tiles).
    out_dtype: e.g. jnp.bfloat16 to halve the output HBM stream (the cast
        happens inside the kernel; accumulation / bias add stay f32).
    """
    B, C, T, J = x.shape
    R = weight.shape[0]
    M = B * C * T
    out_dtype = x.dtype if out_dtype is None else out_dtype

    # --- Row fold: free reshape that makes input/output lane-dense. ---
    fold = 1
    for f in (4, 2):
        if M % f == 0:
            fold = f
            break
    Jw, Rw, Mf = J * fold, R * fold, M // fold

    x2d = x.reshape(Mf, Jw)

    wT = weight.T.astype(x.dtype)                             # (J, R)
    if fold == 1:
        w = wT
    else:
        # blockdiag(W.T, ..., W.T): folded row applies the same Linear
        # independently to each of the `fold` original rows.
        w = jnp.kron(jnp.eye(fold, dtype=wT.dtype), wT)       # (Jw, Rw)
    b = jnp.tile(bias.reshape(1, R).astype(jnp.float32), (1, fold))  # (1, Rw)

    # Sublane multiple: 16 for 2-byte dtypes on either side, else 8.
    x_bytes = jnp.dtype(x.dtype).itemsize
    o_bytes = jnp.dtype(out_dtype).itemsize
    sub = 16 if min(x_bytes, o_bytes) == 2 else 8
    tm, grid_m = _pick_tile(Mf, tm, sub)

    # VMEM: double-buffered streaming blocks + resident weight/bias. Only
    # raise the scoped limit if we would exceed the v5e 16 MiB default.
    vmem_need = 2 * tm * (Jw * x_bytes + Rw * o_bytes) + Jw * Rw * x_bytes + Rw * 4
    vmem_limit = None
    if vmem_need > 12 * 1024 * 1024:
        vmem_limit = min(int(vmem_need * 1.5), 48 * 1024 * 1024)

    cost = pl.CostEstimate(
        flops=2 * M * J * R,
        transcendentals=0,
        bytes_accessed=M * (J * x_bytes + R * o_bytes) + J * R * x_bytes + R * 4,
    )

    out2d = pl.pallas_call(
        _linear_kernel,
        out_shape=jax.ShapeDtypeStruct((Mf, Rw), out_dtype),
        grid_spec=pl.GridSpec(
            grid=(grid_m,),
            in_specs=[
                pl.BlockSpec((tm, Jw), lambda i: (i, 0)),   # streaming rows
                pl.BlockSpec((Jw, Rw), lambda i: (0, 0)),   # full weight resident
                pl.BlockSpec((1, Rw), lambda i: (0, 0)),    # bias resident
            ],
            out_specs=pl.BlockSpec((tm, Rw), lambda i: (i, 0)),
        ),
        compiler_params=pltpu.CompilerParams(
            dimension_semantics=("parallel",),
            vmem_limit_bytes=vmem_limit),
        cost_estimate=cost,
    )(x2d, w, b)

    # Free reshape: row i of the folded output is [out[fold*i] | out[fold*i+1] | ...].
    return out2d.reshape(B, C, T, R)


def init_linear_params(key, in_features, out_features, dtype=jnp.float32):
    """Deterministic init matching torch.nn.Linear defaults (U(-1/sqrt(in), 1/sqrt(in)))."""
    kw, kb = jax.random.split(key)
    bound = 1.0 / math.sqrt(in_features)
    weight = jax.random.uniform(kw, (out_features, in_features), dtype,
                                minval=-bound, maxval=bound)
    bias = jax.random.uniform(kb, (out_features,), dtype,
                              minval=-bound, maxval=bound)
    return weight, bias


if __name__ == "__main__":
    key = jax.random.PRNGKey(0)
    k_x, k_p = jax.random.split(key)

    B, C, T, J = 2, 3, 16, NUM_JOINTS      # M = 96 -> fold=4, Mf=24, grid=2
    x = jax.random.normal(k_x, (B, C, T, J), dtype=jnp.float32)
    weight, bias = init_linear_params(k_p, J, RESIZE_TO)

    ref = jnp.einsum("bctj,rj->bctr", x, weight) + bias

    # f32 path (matches the nn.Linear reference)
    out = learnable_resize_linear(x, weight, bias)
    out = jax.block_until_ready(out)
    assert out.shape == (B, C, T, RESIZE_TO)
    assert jnp.allclose(out, ref, atol=1e-4, rtol=1e-4)

    # bf16-output path (in-kernel cast halves the dominant output HBM stream)
    out_bf16 = learnable_resize_linear(x, weight, bias, out_dtype=jnp.bfloat16)
    out_bf16 = jax.block_until_ready(out_bf16)
    assert out_bf16.shape == (B, C, T, RESIZE_TO)
    assert jnp.allclose(out_bf16.astype(jnp.float32), ref, atol=5e-2, rtol=5e-2)

    print("KERNEL_OK")
</pallas_src>

<mosaic_0001>
module attributes {stable_mosaic.version = 11 : i64} {
  func.func @_linear_kernel(%arg0: i32, %arg1: memref<16x156xf32, #tpu.memory_space<vmem>>, %arg2: memref<156x256xf32, #tpu.memory_space<vmem>>, %arg3: memref<1x256xf32, #tpu.memory_space<vmem>>, %arg4: memref<16x256xf32, #tpu.memory_space<vmem>>) attributes {dimension_semantics = [#tpu.dimension_semantics<parallel>], iteration_bounds = array<i64: 2>, scalar_prefetch = 0 : i64, scratch_operands = 0 : i64, tpu.core_type = #tpu.core_type<tc>, window_params = [{transform_indices = @transform_0, window_bounds = array<i64: 16, 156>}, {pipeline_mode = #tpu.pipeline_mode<synchronous>, transform_indices = @transform_1, window_bounds = array<i64: 156, 256>}, {pipeline_mode = #tpu.pipeline_mode<synchronous>, transform_indices = @transform_2, window_bounds = array<i64: 1, 256>}, {transform_indices = @transform_3, window_bounds = array<i64: 16, 256>}]} {
    %c0 = arith.constant 0 : index
    %c0_0 = arith.constant 0 : index
    %0 = vector.load %arg1[%c0, %c0_0] : memref<16x156xf32, #tpu.memory_space<vmem>>, vector<16x156xf32>
    %c0_1 = arith.constant 0 : index
    %c0_2 = arith.constant 0 : index
    %1 = vector.load %arg2[%c0_1, %c0_2] : memref<156x256xf32, #tpu.memory_space<vmem>>, vector<156x256xf32>
    %cst = arith.constant dense<0.000000e+00> : vector<16x256xf32>
    %2 = tpu.matmul %0, %1, %cst {dimension_numbers = #tpu.dot_dimension_numbers<[1], [0], [0], [1], [0, 0, 1, 1], [], []>} : vector<16x156xf32>, vector<156x256xf32>, vector<16x256xf32> -> vector<16x256xf32>
    %c0_3 = arith.constant 0 : index
    %c0_4 = arith.constant 0 : index
    %3 = vector.load %arg3[%c0_3, %c0_4] : memref<1x256xf32, #tpu.memory_space<vmem>>, vector<1x256xf32>
    %4 = vector.broadcast %3 : vector<1x256xf32> to vector<16x256xf32>
    %5 = arith.addf %2, %4 : vector<16x256xf32>
    %c0_5 = arith.constant 0 : index
    %c0_6 = arith.constant 0 : index
    %6 = vector.load %arg4[%c0_5, %c0_6] : memref<16x256xf32, #tpu.memory_space<vmem>>, vector<16x256xf32>
    tpu.vector_store %arg4[%c0_5, %c0_6], %5 {strides = array<i32>} : memref<16x256xf32, #tpu.memory_space<vmem>>, vector<16x256xf32>,
    return
  }
  func.func @transform_0(%arg0: i32) -> (i32, i32) {
    %c0_i32 = arith.constant 0 : i32
    %c0_i32_0 = arith.constant 0 : i32
    return %arg0, %c0_i32 : i32, i32
  }
  func.func @transform_1(%arg0: i32) -> (i32, i32) {
    %c0_i32 = arith.constant 0 : i32
    %c0_i32_0 = arith.constant 0 : i32
    %c0_i32_1 = arith.constant 0 : i32
    return %c0_i32, %c0_i32_0 : i32, i32
  }
  func.func @transform_2(%arg0: i32) -> (i32, i32) {
    %c0_i32 = arith.constant 0 : i32
    %c0_i32_0 = arith.constant 0 : i32
    %c0_i32_1 = arith.constant 0 : i32
    return %c0_i32, %c0_i32_0 : i32, i32
  }
  func.func @transform_3(%arg0: i32) -> (i32, i32) {
    %c0_i32 = arith.constant 0 : i32
    %c0_i32_0 = arith.constant 0 : i32
    return %arg0, %c0_i32 : i32, i32
  }
}

</mosaic_0001>

<llo_original>
// kernel: tpu_custom_call.1
$region0: #{tpu_custom_call.1}
  #allocation0 [shape = 'u32[]', space=smem, size = 0x4, offset = 0x4, fixed_abs, tag = 'smem constant byte address 0x4 - core index']
  #allocation1 [shape = 'u32[144,128]{1,0:T(1,128)}', space=vmem, size = 0x12000, scoped, tag = 'internal scratch']
  %s0 = inlined_call_operand.hbm [shape: f32[24,156], index: 0, kind: input, shape index: {}]
  %s1 = inlined_call_operand.hbm [shape: f32[156,256], index: 1, kind: input, shape index: {}]
  %s2 = inlined_call_operand.vmem [shape: f32[1,256], index: 2, kind: input, shape index: {}]
  %s3 = inlined_call_operand.hbm [shape: f32[24,256], index: 3, kind: output, shape index: {}]
  %s4 = sld [smem:[#allocation0]]
  $region53: #{tpu_custom_call.1} parent=0
    _
  %s6 = ssub.s32 1, %s4
  %s7 = scalar_select 0, %s6, %s4
  $region1: #{tpu_custom_call.1} parent=0
    #allocation2 [shape = 'u8[32768]{0}', space=vmem, size = 0x8000, scoped, tag = 'input window, operand 0']
    #allocation3 [shape = 's32[2]{0}', space=sflag, size = 0x8, scoped, tag = 'scoped memory for tpu_custom_call.1']
    #allocation4 [shape = 's32[2]{0}', space=sflag, size = 0x8, scoped, tag = 'scoped memory for tpu_custom_call.1']
    #allocation5 [shape = 'u8[163840]{0}', space=vmem, size = 0x28000, scoped, tag = 'input window, operand 1, single buffered']
    #allocation6 [shape = 's32[1]{0}', space=sflag, size = 0x4, scoped, tag = 'scoped memory for tpu_custom_call.1']
    #allocation7 [shape = 'u8[32768]{0}', space=vmem, size = 0x8000, scoped, tag = 'output window, operand 0']
    %8 = vsyncpa [#allocation3], 0
    %s9 = scalar_lea.sflag [#allocation3], 1
    %10 = vsyncpa %s9, 0
    %11 = vsyncpa [#allocation6], 0
    %12 = vsyncpa [#allocation4], 0
    %s13 = scalar_lea.sflag [#allocation4], 1
    %14 = vsyncpa %s13, 0
    loop: start=0, step=1, limit=4
    $region2: #{tpu_custom_call.1} parent=1 // loop_pre_header
      _
    $region3: #{tpu_custom_call.1} parent=1 // loop_header
      %s16 = sphi 0, %s20
      %p17 = scmp.ge.s32.totalorder %s16, 4
      %s26 = sphi 0, %s28
      %s29 = sphi 0, %s26
      %s30 = sphi 0, %s29
      %s46 = sphi 0, %s30
      %s50 = sphi 0, %s50
      %s52 = sphi 0, %s50
      %s53 = sphi 0, %s52
      %s67 = sphi 0, %s53
      %s71 = sphi 0, %s71
      %s73 = sphi 0, %s71
      %s74 = sphi 0, %s73
      %s88 = sphi 0, %s74
      %s94 = sphi 0, %s96
      %s97 = sphi 0, %s94
      %s98 = sphi 0, %s97
      %s114 = sphi 0, %s98
    $region4: #{tpu_custom_call.1} parent=1 // loop_header_branch
      %19 = sbr.rel (%p17) target = $region8
    $region5: #{tpu_custom_call.1} parent=1 // loop_body
      %s21 = ssub.s32 %s16, 1
      %s22 = ssub.s32 %s16, 2
      %s23 = sadd.s32 %s16, 1
      %s24 = ssub.s32 %s16, %s23
      %p25 = scmp.eq.s32.totalorder %s24, 0
      %s27 = sadd.s32 %s26, 1
      %s28 = scalar_select %p25, %s26, %s27
      %p31 = pneg %p25
      %p32 = scmp.eq.s32.totalorder %s16, 1
      %p33 = por %p31, %p32
      %p34 = scmp.ne.s32.totalorder %s26, %s29
      %p35 = scmp.eq.s32.totalorder %s16, 0
      %p36 = por %p34, %p35
      %p37 = scmp.ne.s32.totalorder %s26, %s29
      %p38 = scmp.eq.s32.totalorder %s21, 1
      %p39 = por %p37, %p38
      %p40 = scmp.ne.s32.totalorder %s29, %s30
      %p41 = scmp.eq.s32.totalorder %s21, 0
      %p42 = por %p40, %p41
      %p43 = scmp.ne.s32.totalorder %s29, %s30
      %p44 = scmp.eq.s32.totalorder %s22, 1
      %p45 = por %p43, %p44
      %p47 = scmp.ne.s32.totalorder %s30, %s46
      %p48 = scmp.eq.s32.totalorder %s22, 0
      %p49 = por %p47, %p48
      %s51 = sadd.s32 %s50, 1
      %p54 = scmp.eq.s32.totalorder %s16, 1
      %p55 = scmp.ne.s32.totalorder %s50, %s52
      %p56 = scmp.eq.s32.totalorder %s16, 0
      %p57 = por %p55, %p56
      %p58 = scmp.ne.s32.totalorder %s50, %s52
      %p59 = scmp.eq.s32.totalorder %s21, 1
      %p60 = por %p58, %p59
      %p61 = scmp.ne.s32.totalorder %s52, %s53
      %p62 = scmp.eq.s32.totalorder %s21, 0
      %p63 = por %p61, %p62
      %p64 = scmp.ne.s32.totalorder %s52, %s53
      %p65 = scmp.eq.s32.totalorder %s22, 1
      %p66 = por %p64, %p65
      %p68 = scmp.ne.s32.totalorder %s53, %s67
      %p69 = scmp.eq.s32.totalorder %s22, 0
      %p70 = por %p68, %p69
      %s72 = sadd.s32 %s71, 1
      %p75 = scmp.eq.s32.totalorder %s16, 1
      %p76 = scmp.ne.s32.totalorder %s71, %s73
      %p77 = scmp.eq.s32.totalorder %s16, 0
      %p78 = por %p76, %p77
      %p79 = scmp.ne.s32.totalorder %s71, %s73
      %p80 = scmp.eq.s32.totalorder %s21, 1
      %p81 = por %p79, %p80
      %p82 = scmp.ne.s32.totalorder %s73, %s74
      %p83 = scmp.eq.s32.totalorder %s21, 0
      %p84 = por %p82, %p83
      %p85 = scmp.ne.s32.totalorder %s73, %s74
      %p86 = scmp.eq.s32.totalorder %s22, 1
      %p87 = por %p85, %p86
      %p89 = scmp.ne.s32.totalorder %s74, %s88
      %p90 = scmp.eq.s32.totalorder %s22, 0
      %p91 = por %p89, %p90
      %s92 = ssub.s32 %s16, %s23
      %p93 = scmp.eq.s32.totalorder %s92, 0
      %s95 = sadd.s32 %s94, 1
      %s96 = scalar_select %p93, %s94, %s95
      %p99 = pneg %p93
      %p100 = scmp.eq.s32.totalorder %s16, 1
      %p101 = por %p99, %p100
      %p102 = scmp.ne.s32.totalorder %s94, %s97
      %p103 = scmp.eq.s32.totalorder %s16, 0
      %p104 = por %p102, %p103
      %p105 = scmp.ne.s32.totalorder %s94, %s97
      %p106 = scmp.eq.s32.totalorder %s21, 1
      %p107 = por %p105, %p106
      %p108 = scmp.ne.s32.totalorder %s97, %s98
      %p109 = scmp.eq.s32.totalorder %s21, 0
      %p110 = por %p108, %p109
      %p111 = scmp.ne.s32.totalorder %s97, %s98
      %p112 = scmp.eq.s32.totalorder %s22, 1
      %p113 = por %p111, %p112
      %p115 = scmp.ne.s32.totalorder %s98, %s114
      %p116 = scmp.eq.s32.totalorder %s22, 0
      %p117 = por %p115, %p116
      %p118 = scmp.le.s32.totalorder 1, %s16
      %p119 = scmp.lt.s32.totalorder %s16, 3
      %p120 = pnand %p118, %p119
      %p121 = pneg %p120
      // Predicated region
      $region9: #{tpu_custom_call.1} parent=5 // pred_check
        _
      $region10: #{tpu_custom_call.1} parent=5 // pred_check_branch
        %123 = sbr.rel (%p120) target = $region12
      $region11: #{tpu_custom_call.1} parent=5 // pred_region
        %s124 = ssub.s32 %s16, 1
        // Predicated region
        $region13: #{tpu_custom_call.1} parent=11 // pred_check
          %p125 = pneg %p63
        $region14: #{tpu_custom_call.1} parent=11 // pred_check_branch
          %127 = sbr.rel (%p125) target = $region16
        $region15: #{tpu_custom_call.1} parent=11 // pred_region
          %s129 = ssub.s32 5120, 5120
          %130 = vsyncadd [#allocation6], %s129
          %s131 = sshll.u32 [#allocation5], 4
          %s132 = int_to_ptr.vmem [resolvable:$true] %s131
          %137 = dma.hbm_to_vmem [thread:$0]  %s1, 5120, %s132, [#allocation6], 256, 256, 16
        $region16: #{tpu_custom_call.1} parent=11 // pred_fallthru
          _
        // Predicated region
        $region17: #{tpu_custom_call.1} parent=11 // pred_check
          %p138 = pneg %p84
        $region18: #{tpu_custom_call.1} parent=11 // pred_check_branch
          %140 = sbr.rel (%p138) target = $region20
        $region19: #{tpu_custom_call.1} parent=11 // pred_region
          _
        $region20: #{tpu_custom_call.1} parent=11 // pred_fallthru
          _
      $region12: #{tpu_custom_call.1} parent=5 // pred_fallthru
        _
      %p141 = scmp.lt.s32.totalorder %s16, 2
      // Predicated region
      $region21: #{tpu_custom_call.1} parent=5 // pred_check
        %p142 = pneg %p141
      $region22: #{tpu_custom_call.1} parent=5 // pred_check_branch
        %144 = sbr.rel (%p142) target = $region24
      $region23: #{tpu_custom_call.1} parent=5 // pred_region
        // Predicated region
        $region25: #{tpu_custom_call.1} parent=23 // pred_check
          %p145 = pneg %p36
        $region26: #{tpu_custom_call.1} parent=23 // pred_check_branch
          %147 = sbr.rel (%p145) target = $region28
        $region27: #{tpu_custom_call.1} parent=23 // pred_region
          %s148 = sand.u32 %s26, 1
          %s149 = scalar_lea.sflag [#allocation3], %s148
          %s150 = sand.u32 %s26, 1
          %s151 = smul.addr %s150, 32
          %s152 = scalar_lea.vmem [#allocation2], %s151
          %s153 = smul.u32 2, %s16
          %s154 = ssub.s32 3, %s153
          %p155 = scmp.lt.s32.totalorder %s154, 2
          %s156 = scalar_select %p155, %s154, 2
          %s157 = smul.u32 128, %s156
          %s158 = smul.u32 %s157, 2
          %s160 = ssub.s32 512, %s158
          %161 = vsyncadd %s149, %s160
          %p162 = scmp.ne.s32.totalorder 0, %s158
          %s163 = smul.addr %s153, 2
          %s164 = smul.addr %s163, 128
          %s165 = scalar_lea.hbm %s0, %s164
          %s166 = smul.u32 16, %s156
          %s167 = sshll.u32 %s152, 4
          %s168 = int_to_ptr.vmem [resolvable:$true] %s167
          %s169 = sshll.u32 %s166, 4
          %173 = dma.hbm_to_vmem [thread:$0]  (%p162), %s165, %s169, %s168, %s149, 256, 256, 16
        $region28: #{tpu_custom_call.1} parent=23 // pred_fallthru
          _
      $region24: #{tpu_custom_call.1} parent=5 // pred_fallthru
        _
      %p174 = scmp.le.s32.totalorder 1, %s16
      %p175 = scmp.lt.s32.totalorder %s16, 3
      %p176 = pnand %p174, %p175
      %p177 = pneg %p176
      // Predicated region
      $region29: #{tpu_custom_call.1} parent=5 // pred_check
        _
      $region30: #{tpu_custom_call.1} parent=5 // pred_check_branch
        %179 = sbr.rel (%p176) target = $region32
      $region31: #{tpu_custom_call.1} parent=5 // pred_region
        %s180 = ssub.s32 %s16, 1
        %s181 = sand.u32 %s29, 1
        %s182 = scalar_lea.sflag [#allocation3], %s181
        %s183 = sand.u32 %s29, 1
        %s184 = smul.addr %s183, 32
        %s185 = scalar_lea.vmem [#allocation2], %s184
        // Predicated region
        $region33: #{tpu_custom_call.1} parent=31 // pred_check
          %p186 = pneg %p42
        $region34: #{tpu_custom_call.1} parent=31 // pred_check_branch
          %188 = sbr.rel (%p186) target = $region36
        $region35: #{tpu_custom_call.1} parent=31 // pred_region
          %189 = dma.done %s182, 512
        $region36: #{tpu_custom_call.1} parent=31 // pred_fallthru
          _
        // Predicated region
        $region37: #{tpu_custom_call.1} parent=31 // pred_check
          %p190 = pneg %p63
        $region38: #{tpu_custom_call.1} parent=31 // pred_check_branch
          %192 = sbr.rel (%p190) target = $region40
        $region39: #{tpu_custom_call.1} parent=31 // pred_region
          %193 = dma.done [#allocation6], 5120
        $region40: #{tpu_custom_call.1} parent=31 // pred_fallthru
          _
        %s194 = sand.u32 %s29, 1
        %s195 = scalar_lea.sflag [#allocation3], %s194
        %s196 = sand.u32 %s29, 1
        %s197 = smul.addr %s196, 32
        %s198 = scalar_lea.vmem [#allocation2], %s197
        %p199 = pneg %p42
        %p200 = pneg %p39
        %p201 = pneg %p63
        %p202 = pneg %p60
        %p203 = pneg %p84
        %p204 = pneg %p81
        %p205 = pneg %p110
        %p206 = pneg %p107
        %s207 = sand.u32 %s97, 1
        %s208 = scalar_lea.sflag [#allocation4], %s207
        %s209 = sand.u32 %s97, 1
        %s210 = smul.addr %s209, 32
        %s211 = scalar_lea.vmem [#allocation7], %s210
        %s212 = smul.u32 2, %s21
        %s213 = ssub.s32 3, %s212
        %p214 = scmp.lt.s32.totalorder %s213, 2
        %s215 = scalar_select %p214, %s213, 2
        %s216 = smul.u32 128, %s215
        %s217 = smul.u32 %s216, 2
        %s218 = smul.u32 2, %s21
        %s219 = ssub.s32 3, %s218
        %p220 = scmp.lt.s32.totalorder %s219, 2
        %s221 = scalar_select %p220, %s219, 2
        %s222 = smul.u32 128, %s221
        %s223 = smul.u32 %s222, 2
        %v224 = vld [vmem:[%s185] sm:$0xff]
        %v225 = vld [vmem:[%s185 + $0x8] sm:$0xff]
        %v226 = vld [vmem:[%s185 + $0x10] sm:$0xff]
        %v227 = vld [vmem:[%s185 + $0x18] sm:$0xff]
        %v228 = vld [vmem:[#allocation5] sm:$0xff]
        %v229 = vld [vmem:[#allocation5 + $0x8] sm:$0xff]
        %v230 = vld [vmem:[#allocation5 + $0x10] sm:$0xff]
        %v231 = vld [vmem:[#allocation5 + $0x18] sm:$0xff]
        %v232 = vld [vmem:[#allocation5 + $0x20] sm:$0xff]
        %v233 = vld [vmem:[#allocation5 + $0x28] sm:$0xff]
        %v234 = vld [vmem:[#allocation5 + $0x30] sm:$0xff]
        %v235 = vld [vmem:[#allocation5 + $0x38] sm:$0xff]
        %v236 = vld [vmem:[#allocation5 + $0x40] sm:$0xff]
        %v237 = vld [vmem:[#allocation5 + $0x48] sm:$0xff]
        %v238 = vld [vmem:[#allocation5 + $0x50] sm:$0xff]
        %v239 = vld [vmem:[#allocation5 + $0x58] sm:$0xff]
        %v240 = vld [vmem:[#allocation5 + $0x60] sm:$0xff]
        %v241 = vld [vmem:[#allocation5 + $0x68] sm:$0xff]
        %v242 = vld [vmem:[#allocation5 + $0x70] sm:$0xff]
        %v243 = vld [vmem:[#allocation5 + $0x78] sm:$0xff]
        %v244 = vld [vmem:[#allocation5 + $0x80] sm:$0xff]
        %v245 = vld [vmem:[#allocation5 + $0x88] sm:$0xff]
        %v246 = vld [vmem:[#allocation5 + $0x90] sm:$0xff]
        %v247 = vld [vmem:[#allocation5 + $0x98] sm:$0xff]
        %v248 = vld [vmem:[#allocation5 + $0xa0] sm:$0xff]
        %v249 = vld [vmem:[#allocation5 + $0xa8] sm:$0xff]
        %v250 = vld [vmem:[#allocation5 + $0xb0] sm:$0xff]
        %v251 = vld [vmem:[#allocation5 + $0xb8] sm:$0xff]
        %v252 = vld [vmem:[#allocation5 + $0xc0] sm:$0xff]
        %v253 = vld [vmem:[#allocation5 + $0xc8] sm:$0xff]
        %v254 = vld [vmem:[#allocation5 + $0xd0] sm:$0xff]
        %v255 = vld [vmem:[#allocation5 + $0xd8] sm:$0xff]
        %v256 = vld [vmem:[#allocation5 + $0xe0] sm:$0xff]
        %v257 = vld [vmem:[#allocation5 + $0xe8] sm:$0xff]
        %v258 = vld [vmem:[#allocation5 + $0xf0] sm:$0xff]
        %v259 = vld [vmem:[#allocation5 + $0xf8] sm:$0xff]
        %v260 = vld [vmem:[#allocation5 + $0x100] sm:$0xff]
        %v261 = vld [vmem:[#allocation5 + $0x108] sm:$0xff]
        %v262 = vld [vmem:[#allocation5 + $0x110] sm:$0xff]
        %v263 = vld [vmem:[#allocation5 + $0x118] sm:$0xff]
        %v264 = vld [vmem:[#allocation5 + $0x120] sm:$0xff]
        %v265 = vld [vmem:[#allocation5 + $0x128] sm:$0xff]
        %v266 = vld [vmem:[#allocation5 + $0x130] sm:$0xf]
        %v267 = vld [vmem:[#allocation5 + $0x138] sm:$0xf]
        %v268 = vld [vmem:[%s2] sm:$0x3]
        %v270 = vlaneseq
        %v271 = vshrl.u32 %v270, 7
        %v272 = vsub.s32 0, %v271
        %v273 = vrot.slane %v268, %v272
        %v274 = vlaneseq
        %v275 = vshrl.u32 %v274, 7
        %v276 = vsub.s32 1, %v275
        %v277 = vrot.slane %v268, %v276
        %vm280 = vcmask 228352
        %v282 = vsel %vm280, %v225, 0
        %v285 = vsel %vm280, %v227, 0
        %vm287 = vcmask 1043456
        %v289 = vsel %vm287, %v266, 0
        %v292 = vsel %vm287, %v267, 0
        %294 = vmatprep.subr.mxu0 %v259
        %295 = vmatpush1.msra.mxu0 %v258
        %296 = vmatprep.subr.mxu0 %v257
        %297 = vmatpush1.msra.mxu0 %v256
        %298 = vmatprep.subr.mxu0 %v255
        %299 = vmatpush1.msra.mxu0 %v254
        %300 = vmatprep.subr.mxu0 %v253
        %301 = vmatpush1.msra.mxu0 %v252
        %302 = vmatprep.subr.mxu0 %v251
        %303 = vmatpush1.msra.mxu0 %v250
        %304 = vmatprep.subr.mxu0 %v249
        %305 = vmatpush1.msra.mxu0 %v248
        %306 = vmatprep.subr.mxu0 %v247
        %307 = vmatpush1.msra.mxu0 %v246
        %308 = vmatprep.subr.mxu0 %v245
        %309 = vmatpush1.msra.mxu0 %v244
        %310 = vmatprep.subr.mxu0 %v243
        %311 = vmatpush1.msra.mxu0 %v242
        %312 = vmatprep.subr.mxu0 %v241
        %313 = vmatpush1.msra.mxu0 %v240
        %314 = vmatprep.subr.mxu0 %v239
        %315 = vmatpush1.msra.mxu0 %v238
        %316 = vmatprep.subr.mxu0 %v237
        %317 = vmatpush1.msra.mxu0 %v236
        %318 = vmatprep.subr.mxu0 %v235
        %319 = vmatpush1.msra.mxu0 %v234
        %320 = vmatprep.subr.mxu0 %v233
        %321 = vmatpush1.msra.mxu0 %v232
        %322 = vmatprep.subr.mxu0 %v231
        %323 = vmatpush1.msra.mxu0 %v230
        %324 = vmatprep.subr.mxu0 %v229
        %325 = vmatpush1.msra.mxu0 %v228
        %326 = vmatprep.subr.mxu0 0.0
        %327 = vmatpush2.msra.mxu0 0.0
        %328 = vmatprep.subr.mxu0 0.0
        %329 = vmatpush2.msra.mxu0 0.0
        %330 = vmatprep.subr.mxu0 0.0
        %331 = vmatpush2.msra.mxu0 0.0
        %332 = vmatprep.subr.mxu0 0.0
        %333 = vmatpush2.msra.mxu0 0.0
        %334 = vmatprep.subr.mxu0 0.0
        %335 = vmatpush2.msra.mxu0 0.0
        %336 = vmatprep.subr.mxu0 0.0
        %337 = vmatpush2.msra.mxu0 0.0
        %338 = vmatprep.subr.mxu0 0.0
        %339 = vmatpush2.msra.mxu0 0.0
        %340 = vmatprep.subr.mxu0 0.0
        %341 = vmatpush2.msra.mxu0 0.0
        %342 = vmatprep.subr.mxu0 0.0
        %343 = vmatpush2.msra.mxu0 0.0
        %344 = vmatprep.subr.mxu0 0.0
        %345 = vmatpush2.msra.mxu0 0.0
        %346 = vmatprep.subr.mxu0 0.0
        %347 = vmatpush2.msra.mxu0 0.0
        %348 = vmatprep.subr.mxu0 0.0
        %349 = vmatpush2.msra.mxu0 0.0
        %350 = vmatprep.subr.mxu0 %v292
        %351 = vmatpush2.msra.mxu0 %v289
        %352 = vmatprep.subr.mxu0 %v265
        %353 = vmatpush2.msra.mxu0 %v264
        %354 = vmatprep.subr.mxu0 %v263
        %355 = vmatpush2.msra.mxu0 %v262
        %356 = vmatprep.subr.mxu0 %v261
        %357 = vmatpush2.msra.mxu0 %v260
        %358 = vmatprep.mubr.f32.mxu0 %v282
        %359 = vmatmul.mubr.f32.gmra.mxu0 %v224
        %v360 = vpop.f32.mrf.mxu0
        %v361 = vadd.f32 %v273, %v360
        %v362 = vpop.f32.mrf.mxu0
        %v363 = vadd.f32 %v277, %v362
        %364 = vmatprep.mubr.f32.mxu0 %v285
        %365 = vmatmul.mubr.f32.gmra.mxu0 %v226
        %v366 = vpop.f32.mrf.mxu0
        %v367 = vadd.f32 %v273, %v366
        %v368 = vpop.f32.mrf.mxu0
        %v369 = vadd.f32 %v277, %v368
        %370 = vdwg.mxu0
        %371 = vst [vmem:[%s211] sm:$0xff] %v361
        %372 = vst [vmem:[%s211 + $0x8] sm:$0xff] %v363
        %373 = vst [vmem:[%s211 + $0x10] sm:$0xff] %v367
        %374 = vst [vmem:[%s211 + $0x18] sm:$0xff] %v369
        %s375 = sand.u32 %s97, 1
        %s376 = scalar_lea.sflag [#allocation4], %s375
        %s377 = sand.u32 %s97, 1
        %s378 = smul.addr %s377, 32
        %s379 = scalar_lea.vmem [#allocation7], %s378
        // Predicated region
        $region41: #{tpu_custom_call.1} parent=31 // pred_check
          %p380 = pneg %p107
        $region42: #{tpu_custom_call.1} parent=31 // pred_check_branch
          %382 = sbr.rel (%p380) target = $region44
        $region43: #{tpu_custom_call.1} parent=31 // pred_region
          %s383 = smul.u32 2, %s21
          %s384 = ssub.s32 3, %s383
          %p385 = scmp.lt.s32.totalorder %s384, 2
          %s386 = scalar_select %p385, %s384, 2
          %s387 = smul.u32 128, %s386
          %s388 = smul.u32 %s387, 2
          %s390 = ssub.s32 512, %s388
          %391 = vsyncadd %s376, %s390
          %p392 = scmp.ne.s32.totalorder 0, %s388
          %s393 = smul.addr %s383, 2
          %s394 = smul.addr %s393, 128
          %s395 = scalar_lea.hbm %s3, %s394
          %s396 = smul.u32 16, %s386
          %s397 = sshll.u32 %s379, 4
          %s398 = int_to_ptr.vmem [resolvable:$true] %s397
          %s399 = sshll.u32 %s396, 4
          %403 = dma.vmem_to_hbm [thread:$0]  (%p392), %s398, %s399, %s395, %s376, 256, 256, 16
        $region44: #{tpu_custom_call.1} parent=31 // pred_fallthru
          _
      $region32: #{tpu_custom_call.1} parent=5 // pred_fallthru
        _
      %p404 = scmp.le.s32.totalorder 2, %s16
      // Predicated region
      $region45: #{tpu_custom_call.1} parent=5 // pred_check
        %p405 = pneg %p404
      $region46: #{tpu_custom_call.1} parent=5 // pred_check_branch
        %407 = sbr.rel (%p405) target = $region48
      $region47: #{tpu_custom_call.1} parent=5 // pred_region
        %s408 = ssub.s32 %s16, 2
        // Predicated region
        $region49: #{tpu_custom_call.1} parent=47 // pred_check
          %p409 = pneg %p113
        $region50: #{tpu_custom_call.1} parent=47 // pred_check_branch
          %411 = sbr.rel (%p409) target = $region52
        $region51: #{tpu_custom_call.1} parent=47 // pred_region
          %s412 = sand.u32 %s98, 1
          %s413 = scalar_lea.sflag [#allocation4], %s412
          %s414 = sand.u32 %s98, 1
          %s415 = smul.addr %s414, 32
          %s416 = scalar_lea.vmem [#allocation7], %s415
          %417 = dma.done %s413, 512
        $region52: #{tpu_custom_call.1} parent=47 // pred_fallthru
          _
      $region48: #{tpu_custom_call.1} parent=5 // pred_fallthru
        _
    $region6: #{tpu_custom_call.1} parent=1 // loop_footer
      %s20 = sadd.s32 1, %s16
    $region7: #{tpu_custom_call.1} parent=1 // loop_footer_branch
      %15 = sbr.rel target = $region3
    $region8: #{tpu_custom_call.1} parent=1 // loop_exit
      _
    %418 = vsyncpa [#allocation3], 1
    %s419 = scalar_lea.sflag [#allocation3], 1
    %420 = vsyncpa %s419, 1
    %421 = vsyncpa [#allocation6], 1
    %422 = vsyncpa [#allocation4], 1
    %s423 = scalar_lea.sflag [#allocation4], 1
    %424 = vsyncpa %s423, 1

</llo_original>
